<compile_context>
chip_gen: v7x
topology: tpu7x:2x2x1
jax: 0.10.0
libtpu: 0.0.40
codegen_flags: <defaults>
</compile_context>

<pallas_src>
import functools

import jax
import jax.numpy as jnp
from jax.experimental import pallas as pl
from jax.experimental.pallas import tpu as pltpu


def _encoder_kernel(x_ref, wx_ref, bx_ref, whh_ref, out_ref, gx_scr):
    T, B, _ = x_ref.shape
    H = out_ref.shape[-1]
    G = 4 * H

    x = x_ref[...]            # (T, B, 2)
    wx = wx_ref[...]          # (2, 4H)   folded input weights (g block pre-scaled x2)
    bx = bx_ref[...]          # (1, 4H)   folded bias          (g block pre-scaled x2)

    # Precompute the x-side gate pre-activations for all timesteps at once.
    # K=2 contraction done as two VPU broadcast-MACs (no tiny MXU matmul),
    # bias folded in here so nothing is re-broadcast inside the loop.
    gx_scr[...] = (x[:, :, 0:1] * wx[0:1, :]
                   + x[:, :, 1:2] * wx[1:2, :]
                   + bx)       # (T, B, 4H)

    whh = whh_ref[...]        # (H, 4H)   g block pre-scaled x2

    # Hoisted lane-constant vectors implementing the exact identity
    #   tanh(z) = 2*sigmoid(2*z) - 1
    # on the "g" (cell-candidate) gate block only; i,f,o stay plain sigmoid.
    lane = jax.lax.broadcasted_iota(jnp.int32, (B, G), 1)
    is_g = (lane >= 2 * H) & (lane < 3 * H)
    gate_mul = jnp.where(is_g, 2.0, 1.0).astype(jnp.float32)   # (B, 4H)
    gate_sub = jnp.where(is_g, 1.0, 0.0).astype(jnp.float32)   # (B, 4H)

    def step(t, carry):
        h, c = carry
        # Only the h @ W_hh matmul + one sigmoid sit on the serial critical path.
        gates = gx_scr[t] + jnp.dot(h, whh, preferred_element_type=jnp.float32)
        sig = jax.nn.sigmoid(gates)                 # one EUP pass over all 4H lanes
        act = sig * gate_mul - gate_sub             # i,f,o = sigmoid ; g = tanh
        i_g = act[:, 0 * H:1 * H]
        f_g = act[:, 1 * H:2 * H]
        g_g = act[:, 2 * H:3 * H]
        o_g = act[:, 3 * H:4 * H]
        c_new = f_g * c + i_g * g_g
        h_new = o_g * jnp.tanh(c_new)
        return (h_new, c_new)

    h0 = jnp.zeros((B, H), jnp.float32)
    c0 = jnp.zeros((B, H), jnp.float32)
    h_fin, _ = jax.lax.fori_loop(0, T, step, (h0, c0), unroll=True)

    out_ref[...] = h_fin.astype(out_ref.dtype)


@functools.partial(jax.jit, static_argnames=("embedding_dim", "h_dim"))
def encoder1_forward(obs_traj, params, *, embedding_dim=64, h_dim=64):
    """obs_traj: (T, B, 2) float32.  Returns final_h: (1, B, h_dim)."""
    T, B, _ = obs_traj.shape
    H = h_dim

    w_emb = params["w_emb"]          # (2, E)    == spatial_embedding.weight.T
    b_emb = params["b_emb"]          # (1, E)
    w_ih = params["w_ih"]            # (E, 4H)   == encoder.weight_ih_l0.T
    w_hh = params["w_hh"]            # (H, 4H)   == encoder.weight_hh_l0.T
    bias = params["bias"]            # (1, 4H)   == b_ih + b_hh

    # Fold the spatial Linear(2, E) into the LSTM input weights (exact algebra):
    #   (x@W_emb + b_emb)@W_ih + bias == x@(W_emb@W_ih) + (b_emb@W_ih + bias)
    hp = jax.lax.Precision.HIGHEST
    w_x = jnp.dot(w_emb, w_ih, precision=hp)           # (2, 4H)
    b_x = jnp.dot(b_emb, w_ih, precision=hp) + bias    # (1, 4H)

    # Pre-scale the "g" gate columns by 2 so the kernel can use the exact
    # identity tanh(z) = 2*sigmoid(2*z) - 1 with a single sigmoid per step.
    g_scale = jnp.concatenate([
        jnp.ones((2 * H,), jnp.float32),
        jnp.full((H,), 2.0, jnp.float32),
        jnp.ones((H,), jnp.float32)])                   # (4H,)
    w_x = w_x * g_scale
    b_x = b_x * g_scale
    w_hh_s = w_hh * g_scale

    # Single kernel invocation: whole sequence + weights resident in VMEM.
    # TODO(synk): for large batched workloads, add a leading "parallel" batch-chunk
    # grid axis (uses both TensorCores on v7x) and pad B to >=128 rows for MXU fill.
    grid_spec = pltpu.PrefetchScalarGridSpec(
        num_scalar_prefetch=0,
        grid=(1,),
        in_specs=[
            pl.BlockSpec((T, B, 2), lambda i: (0, 0, 0)),      # obs_traj
            pl.BlockSpec((2, 4 * H), lambda i: (0, 0)),        # folded W_x
            pl.BlockSpec((1, 4 * H), lambda i: (0, 0)),        # folded b_x
            pl.BlockSpec((H, 4 * H), lambda i: (0, 0)),        # W_hh (g cols x2)
        ],
        out_specs=pl.BlockSpec((B, H), lambda i: (0, 0)),      # final h (2-D)
        scratch_shapes=[
            pltpu.VMEM((T, B, 4 * H), jnp.float32),            # precomputed x-gates
        ],
    )

    final_h = pl.pallas_call(
        _encoder_kernel,
        out_shape=jax.ShapeDtypeStruct((B, H), jnp.float32),
        grid_spec=grid_spec,
        compiler_params=pltpu.CompilerParams(
            dimension_semantics=("arbitrary",)),
    )(obs_traj, w_x, b_x, w_hh_s)

    return final_h[None]   # (1, B, H) == num_layers leading axis


def init_params(key, embedding_dim=64, h_dim=64):
    """Deterministic synthetic parameters (PyTorch-equivalent shapes)."""
    E, H = embedding_dim, h_dim
    k1, k2, k3, k4, k5, k6 = jax.random.split(key, 6)
    s = 0.1
    return {
        # nn.Linear(2, E): weight (E, 2) -> stored transposed (2, E)
        "w_emb": jax.random.uniform(k1, (2, E), jnp.float32, -s, s),
        "b_emb": jax.random.uniform(k2, (1, E), jnp.float32, -s, s),
        # nn.LSTM(E, H): weight_ih_l0 (4H, E) -> transposed (E, 4H)
        "w_ih": jax.random.uniform(k3, (E, 4 * H), jnp.float32, -s, s),
        # weight_hh_l0 (4H, H) -> transposed (H, 4H)
        "w_hh": jax.random.uniform(k4, (H, 4 * H), jnp.float32, -s, s),
        # b_ih + b_hh combined
        "bias": (jax.random.uniform(k5, (1, 4 * H), jnp.float32, -s, s)
                 + jax.random.uniform(k6, (1, 4 * H), jnp.float32, -s, s)),
    }


def reference_forward(obs_traj, params, embedding_dim=64, h_dim=64):
    """Pure-JAX reference replicating the PyTorch forward semantics (unfolded)."""
    T, B, _ = obs_traj.shape
    H = h_dim
    emb = obs_traj.reshape(-1, 2) @ params["w_emb"] + params["b_emb"]
    emb = emb.reshape(T, B, embedding_dim)

    def step(carry, x_t):
        h, c = carry
        gates = x_t @ params["w_ih"] + h @ params["w_hh"] + params["bias"]
        i = jax.nn.sigmoid(gates[:, 0 * H:1 * H])
        f = jax.nn.sigmoid(gates[:, 1 * H:2 * H])
        g = jnp.tanh(gates[:, 2 * H:3 * H])
        o = jax.nn.sigmoid(gates[:, 3 * H:4 * H])
        c = f * c + i * g
        h = o * jnp.tanh(c)
        return (h, c), None

    h0 = jnp.zeros((B, H), jnp.float32)
    c0 = jnp.zeros((B, H), jnp.float32)
    (h_fin, _), _ = jax.lax.scan(step, (h0, c0), emb)
    return h_fin[None]   # (1, B, H)


if __name__ == "__main__":
    EMB_DIM, H_DIM = 64, 64
    SEQ, BATCH = 8, 8

    key = jax.random.PRNGKey(0)
    k_params, k_x = jax.random.split(key)
    params = init_params(k_params, EMB_DIM, H_DIM)
    obs_traj = jax.random.normal(k_x, (SEQ, BATCH, 2), jnp.float32)

    final_h = encoder1_forward(obs_traj, params,
                               embedding_dim=EMB_DIM, h_dim=H_DIM)
    final_h = jax.block_until_ready(final_h)

    ref = reference_forward(obs_traj, params, EMB_DIM, H_DIM)
    assert final_h.shape == (1, BATCH, H_DIM)
    assert jnp.allclose(final_h, ref, atol=1e-4, rtol=1e-4), "mismatch vs reference"

    print("KERNEL_OK")
</pallas_src>

<mosaic_0001>
module attributes {stable_mosaic.version = 11 : i64} {
  func.func @_encoder_kernel(%arg0: i32, %arg1: memref<8x8x2xf32, #tpu.memory_space<vmem>>, %arg2: memref<2x256xf32, #tpu.memory_space<vmem>>, %arg3: memref<1x256xf32, #tpu.memory_space<vmem>>, %arg4: memref<64x256xf32, #tpu.memory_space<vmem>>, %arg5: memref<8x64xf32, #tpu.memory_space<vmem>>, %arg6: memref<8x8x256xf32, #tpu.memory_space<vmem>>) attributes {dimension_semantics = [#tpu.dimension_semantics<arbitrary>], iteration_bounds = array<i64: 1>, scalar_prefetch = 0 : i64, scratch_operands = 1 : i64, tpu.core_type = #tpu.core_type<tc>, window_params = [{pipeline_mode = #tpu.pipeline_mode<synchronous>, transform_indices = @transform_0, window_bounds = array<i64: 8, 8, 2>}, {pipeline_mode = #tpu.pipeline_mode<synchronous>, transform_indices = @transform_1, window_bounds = array<i64: 2, 256>}, {pipeline_mode = #tpu.pipeline_mode<synchronous>, transform_indices = @transform_2, window_bounds = array<i64: 1, 256>}, {pipeline_mode = #tpu.pipeline_mode<synchronous>, transform_indices = @transform_3, window_bounds = array<i64: 64, 256>}, {pipeline_mode = #tpu.pipeline_mode<synchronous>, transform_indices = @transform_4, window_bounds = array<i64: 8, 64>}]} {
    %c0 = arith.constant 0 : index
    %c0_0 = arith.constant 0 : index
    %c0_1 = arith.constant 0 : index
    %0 = vector.load %arg1[%c0, %c0_0, %c0_1] : memref<8x8x2xf32, #tpu.memory_space<vmem>>, vector<8x8x2xf32>
    %c0_2 = arith.constant 0 : index
    %c0_3 = arith.constant 0 : index
    %1 = vector.load %arg2[%c0_2, %c0_3] : memref<2x256xf32, #tpu.memory_space<vmem>>, vector<2x256xf32>
    %c0_4 = arith.constant 0 : index
    %c0_5 = arith.constant 0 : index
    %2 = vector.load %arg3[%c0_4, %c0_5] : memref<1x256xf32, #tpu.memory_space<vmem>>, vector<1x256xf32>
    %3 = vector.extract_strided_slice %0 {offsets = [0, 0, 0], sizes = [8, 8, 1], strides = [1, 1, 1]} : vector<8x8x2xf32> to vector<8x8x1xf32>
    %4 = vector.extract_strided_slice %1 {offsets = [0, 0], sizes = [1, 256], strides = [1, 1]} : vector<2x256xf32> to vector<1x256xf32>
    %5 = vector.shape_cast %4 : vector<1x256xf32> to vector<1x1x256xf32>
    %6 = vector.broadcast %3 : vector<8x8x1xf32> to vector<8x8x256xf32>
    %7 = vector.broadcast %5 : vector<1x1x256xf32> to vector<8x8x256xf32>
    %8 = arith.mulf %6, %7 : vector<8x8x256xf32>
    %9 = vector.extract_strided_slice %0 {offsets = [0, 0, 1], sizes = [8, 8, 1], strides = [1, 1, 1]} : vector<8x8x2xf32> to vector<8x8x1xf32>
    %10 = vector.extract_strided_slice %1 {offsets = [1, 0], sizes = [1, 256], strides = [1, 1]} : vector<2x256xf32> to vector<1x256xf32>
    %11 = vector.shape_cast %10 : vector<1x256xf32> to vector<1x1x256xf32>
    %12 = vector.broadcast %9 : vector<8x8x1xf32> to vector<8x8x256xf32>
    %13 = vector.broadcast %11 : vector<1x1x256xf32> to vector<8x8x256xf32>
    %14 = arith.mulf %12, %13 : vector<8x8x256xf32>
    %15 = arith.addf %8, %14 : vector<8x8x256xf32>
    %16 = vector.shape_cast %2 : vector<1x256xf32> to vector<1x1x256xf32>
    %17 = vector.broadcast %16 : vector<1x1x256xf32> to vector<8x8x256xf32>
    %18 = arith.addf %15, %17 : vector<8x8x256xf32>
    %c0_6 = arith.constant 0 : index
    %c0_7 = arith.constant 0 : index
    %c0_8 = arith.constant 0 : index
    %19 = vector.load %arg6[%c0_6, %c0_7, %c0_8] : memref<8x8x256xf32, #tpu.memory_space<vmem>>, vector<8x8x256xf32>
    tpu.vector_store %arg6[%c0_6, %c0_7, %c0_8], %18 {strides = array<i32>} : memref<8x8x256xf32, #tpu.memory_space<vmem>>, vector<8x8x256xf32>,
    %c0_9 = arith.constant 0 : index
    %c0_10 = arith.constant 0 : index
    %20 = vector.load %arg4[%c0_9, %c0_10] : memref<64x256xf32, #tpu.memory_space<vmem>>, vector<64x256xf32>
    %21 = tpu.iota {dimensions = array<i32: 1>} : vector<8x256xi32>
    %c128_i32 = arith.constant 128 : i32
    %22 = vector.broadcast %c128_i32 : i32 to vector<8x256xi32>
    %23 = arith.cmpi sge, %21, %22 : vector<8x256xi32>
    %c192_i32 = arith.constant 192 : i32
    %24 = vector.broadcast %c192_i32 : i32 to vector<8x256xi32>
    %25 = arith.cmpi slt, %21, %24 : vector<8x256xi32>
    %26 = arith.andi %23, %25 : vector<8x256xi1>
    %cst = arith.constant 2.000000e+00 : f32
    %cst_11 = arith.constant 1.000000e+00 : f32
    %27 = vector.broadcast %cst : f32 to vector<8x256xf32>
    %28 = vector.broadcast %cst_11 : f32 to vector<8x256xf32>
    %29 = arith.select %26, %27, %28 : vector<8x256xi1>, vector<8x256xf32>
    %cst_12 = arith.constant 1.000000e+00 : f32
    %cst_13 = arith.constant 0.000000e+00 : f32
    %30 = vector.broadcast %cst_12 : f32 to vector<8x256xf32>
    %31 = vector.broadcast %cst_13 : f32 to vector<8x256xf32>
    %32 = arith.select %26, %30, %31 : vector<8x256xi1>, vector<8x256xf32>
    %cst_14 = arith.constant 0.000000e+00 : f32
    %33 = vector.broadcast %cst_14 : f32 to vector<8x64xf32>
    %cst_15 = arith.constant 0.000000e+00 : f32
    %34 = vector.broadcast %cst_15 : f32 to vector<8x64xf32>
    %c0_i32 = arith.constant 0 : i32
    %35 = arith.index_cast %c0_i32 : i32 to index
    %c0_16 = arith.constant 0 : index
    %c0_17 = arith.constant 0 : index
    %36 = vector.load %arg6[%35, %c0_16, %c0_17] : memref<8x8x256xf32, #tpu.memory_space<vmem>>, vector<1x8x256xf32>
    %37 = vector.shape_cast %36 : vector<1x8x256xf32> to vector<8x256xf32>
    %cst_18 = arith.constant dense<0.000000e+00> : vector<8x256xf32>
    %38 = tpu.matmul %33, %20, %cst_18 {dimension_numbers = #tpu.dot_dimension_numbers<[1], [0], [0], [1], [0, 0, 1, 1], [], []>} : vector<8x64xf32>, vector<64x256xf32>, vector<8x256xf32> -> vector<8x256xf32>
    %39 = arith.addf %37, %38 : vector<8x256xf32>
    %40 = arith.negf %39 : vector<8x256xf32>
    %41 = math.exp %40 : vector<8x256xf32>
    %cst_19 = arith.constant 1.000000e+00 : f32
    %42 = vector.broadcast %cst_19 : f32 to vector<8x256xf32>
    %43 = arith.addf %42, %41 : vector<8x256xf32>
    %44 = arith.divf %42, %43 : vector<8x256xf32>
    %45 = arith.mulf %44, %29 : vector<8x256xf32>
    %46 = arith.subf %45, %32 : vector<8x256xf32>
    %47 = vector.extract_strided_slice %46 {offsets = [0, 0], sizes = [8, 64], strides = [1, 1]} : vector<8x256xf32> to vector<8x64xf32>
    %48 = vector.extract_strided_slice %46 {offsets = [0, 64], sizes = [8, 64], strides = [1, 1]} : vector<8x256xf32> to vector<8x64xf32>
    %49 = vector.extract_strided_slice %46 {offsets = [0, 128], sizes = [8, 64], strides = [1, 1]} : vector<8x256xf32> to vector<8x64xf32>
    %50 = vector.extract_strided_slice %46 {offsets = [0, 192], sizes = [8, 64], strides = [1, 1]} : vector<8x256xf32> to vector<8x64xf32>
    %51 = arith.mulf %48, %34 : vector<8x64xf32>
    %52 = arith.mulf %47, %49 : vector<8x64xf32>
    %53 = arith.addf %51, %52 : vector<8x64xf32>
    %54 = math.tanh %53 : vector<8x64xf32>
    %55 = arith.mulf %50, %54 : vector<8x64xf32>
    %c1_i32 = arith.constant 1 : i32
    %56 = arith.index_cast %c1_i32 : i32 to index
    %c0_20 = arith.constant 0 : index
    %c0_21 = arith.constant 0 : index
    %57 = vector.load %arg6[%56, %c0_20, %c0_21] : memref<8x8x256xf32, #tpu.memory_space<vmem>>, vector<1x8x256xf32>
    %58 = vector.shape_cast %57 : vector<1x8x256xf32> to vector<8x256xf32>
    %cst_22 = arith.constant dense<0.000000e+00> : vector<8x256xf32>
    %59 = tpu.matmul %55, %20, %cst_22 {dimension_numbers = #tpu.dot_dimension_numbers<[1], [0], [0], [1], [0, 0, 1, 1], [], []>} : vector<8x64xf32>, vector<64x256xf32>, vector<8x256xf32> -> vector<8x256xf32>
    %60 = arith.addf %58, %59 : vector<8x256xf32>
    %61 = arith.negf %60 : vector<8x256xf32>
    %62 = math.exp %61 : vector<8x256xf32>
    %cst_23 = arith.constant 1.000000e+00 : f32
    %63 = vector.broadcast %cst_23 : f32 to vector<8x256xf32>
    %64 = arith.addf %63, %62 : vector<8x256xf32>
    %65 = arith.divf %63, %64 : vector<8x256xf32>
    %66 = arith.mulf %65, %29 : vector<8x256xf32>
    %67 = arith.subf %66, %32 : vector<8x256xf32>
    %68 = vector.extract_strided_slice %67 {offsets = [0, 0], sizes = [8, 64], strides = [1, 1]} : vector<8x256xf32> to vector<8x64xf32>
    %69 = vector.extract_strided_slice %67 {offsets = [0, 64], sizes = [8, 64], strides = [1, 1]} : vector<8x256xf32> to vector<8x64xf32>
    %70 = vector.extract_strided_slice %67 {offsets = [0, 128], sizes = [8, 64], strides = [1, 1]} : vector<8x256xf32> to vector<8x64xf32>
    %71 = vector.extract_strided_slice %67 {offsets = [0, 192], sizes = [8, 64], strides = [1, 1]} : vector<8x256xf32> to vector<8x64xf32>
    %72 = arith.mulf %69, %53 : vector<8x64xf32>
    %73 = arith.mulf %68, %70 : vector<8x64xf32>
    %74 = arith.addf %72, %73 : vector<8x64xf32>
    %75 = math.tanh %74 : vector<8x64xf32>
    %76 = arith.mulf %71, %75 : vector<8x64xf32>
    %c2_i32 = arith.constant 2 : i32
    %77 = arith.index_cast %c2_i32 : i32 to index
    %c0_24 = arith.constant 0 : index
    %c0_25 = arith.constant 0 : index
    %78 = vector.load %arg6[%77, %c0_24, %c0_25] : memref<8x8x256xf32, #tpu.memory_space<vmem>>, vector<1x8x256xf32>
    %79 = vector.shape_cast %78 : vector<1x8x256xf32> to vector<8x256xf32>
    %cst_26 = arith.constant dense<0.000000e+00> : vector<8x256xf32>
    %80 = tpu.matmul %76, %20, %cst_26 {dimension_numbers = #tpu.dot_dimension_numbers<[1], [0], [0], [1], [0, 0, 1, 1], [], []>} : vector<8x64xf32>, vector<64x256xf32>, vector<8x256xf32> -> vector<8x256xf32>
    %81 = arith.addf %79, %80 : vector<8x256xf32>
    %82 = arith.negf %81 : vector<8x256xf32>
    %83 = math.exp %82 : vector<8x256xf32>
    %cst_27 = arith.constant 1.000000e+00 : f32
    %84 = vector.broadcast %cst_27 : f32 to vector<8x256xf32>
    %85 = arith.addf %84, %83 : vector<8x256xf32>
    %86 = arith.divf %84, %85 : vector<8x256xf32>
    %87 = arith.mulf %86, %29 : vector<8x256xf32>
    %88 = arith.subf %87, %32 : vector<8x256xf32>
    %89 = vector.extract_strided_slice %88 {offsets = [0, 0], sizes = [8, 64], strides = [1, 1]} : vector<8x256xf32> to vector<8x64xf32>
    %90 = vector.extract_strided_slice %88 {offsets = [0, 64], sizes = [8, 64], strides = [1, 1]} : vector<8x256xf32> to vector<8x64xf32>
    %91 = vector.extract_strided_slice %88 {offsets = [0, 128], sizes = [8, 64], strides = [1, 1]} : vector<8x256xf32> to vector<8x64xf32>
    %92 = vector.extract_strided_slice %88 {offsets = [0, 192], sizes = [8, 64], strides = [1, 1]} : vector<8x256xf32> to vector<8x64xf32>
    %93 = arith.mulf %90, %74 : vector<8x64xf32>
    %94 = arith.mulf %89, %91 : vector<8x64xf32>
    %95 = arith.addf %93, %94 : vector<8x64xf32>
    %96 = math.tanh %95 : vector<8x64xf32>
    %97 = arith.mulf %92, %96 : vector<8x64xf32>
    %c3_i32 = arith.constant 3 : i32
    %98 = arith.index_cast %c3_i32 : i32 to index
    %c0_28 = arith.constant 0 : index
    %c0_29 = arith.constant 0 : index
    %99 = vector.load %arg6[%98, %c0_28, %c0_29] : memref<8x8x256xf32, #tpu.memory_space<vmem>>, vector<1x8x256xf32>
    %100 = vector.shape_cast %99 : vector<1x8x256xf32> to vector<8x256xf32>
    %cst_30 = arith.constant dense<0.000000e+00> : vector<8x256xf32>
    %101 = tpu.matmul %97, %20, %cst_30 {dimension_numbers = #tpu.dot_dimension_numbers<[1], [0], [0], [1], [0, 0, 1, 1], [], []>} : vector<8x64xf32>, vector<64x256xf32>, vector<8x256xf32> -> vector<8x256xf32>
    %102 = arith.addf %100, %101 : vector<8x256xf32>
    %103 = arith.negf %102 : vector<8x256xf32>
    %104 = math.exp %103 : vector<8x256xf32>
    %cst_31 = arith.constant 1.000000e+00 : f32
    %105 = vector.broadcast %cst_31 : f32 to vector<8x256xf32>
    %106 = arith.addf %105, %104 : vector<8x256xf32>
    %107 = arith.divf %105, %106 : vector<8x256xf32>
    %108 = arith.mulf %107, %29 : vector<8x256xf32>
    %109 = arith.subf %108, %32 : vector<8x256xf32>
    %110 = vector.extract_strided_slice %109 {offsets = [0, 0], sizes = [8, 64], strides = [1, 1]} : vector<8x256xf32> to vector<8x64xf32>
    %111 = vector.extract_strided_slice %109 {offsets = [0, 64], sizes = [8, 64], strides = [1, 1]} : vector<8x256xf32> to vector<8x64xf32>
    %112 = vector.extract_strided_slice %109 {offsets = [0, 128], sizes = [8, 64], strides = [1, 1]} : vector<8x256xf32> to vector<8x64xf32>
    %113 = vector.extract_strided_slice %109 {offsets = [0, 192], sizes = [8, 64], strides = [1, 1]} : vector<8x256xf32> to vector<8x64xf32>
    %114 = arith.mulf %111, %95 : vector<8x64xf32>
    %115 = arith.mulf %110, %112 : vector<8x64xf32>
    %116 = arith.addf %114, %115 : vector<8x64xf32>
    %117 = math.tanh %116 : vector<8x64xf32>
    %118 = arith.mulf %113, %117 : vector<8x64xf32>
    %c4_i32 = arith.constant 4 : i32
    %119 = arith.index_cast %c4_i32 : i32 to index
    %c0_32 = arith.constant 0 : index
    %c0_33 = arith.constant 0 : index
    %120 = vector.load %arg6[%119, %c0_32, %c0_33] : memref<8x8x256xf32, #tpu.memory_space<vmem>>, vector<1x8x256xf32>
    %121 = vector.shape_cast %120 : vector<1x8x256xf32> to vector<8x256xf32>
    %cst_34 = arith.constant dense<0.000000e+00> : vector<8x256xf32>
    %122 = tpu.matmul %118, %20, %cst_34 {dimension_numbers = #tpu.dot_dimension_numbers<[1], [0], [0], [1], [0, 0, 1, 1], [], []>} : vector<8x64xf32>, vector<64x256xf32>, vector<8x256xf32> -> vector<8x256xf32>
    %123 = arith.addf %121, %122 : vector<8x256xf32>
    %124 = arith.negf %123 : vector<8x256xf32>
    %125 = math.exp %124 : vector<8x256xf32>
    %cst_35 = arith.constant 1.000000e+00 : f32
    %126 = vector.broadcast %cst_35 : f32 to vector<8x256xf32>
    %127 = arith.addf %126, %125 : vector<8x256xf32>
    %128 = arith.divf %126, %127 : vector<8x256xf32>
    %129 = arith.mulf %128, %29 : vector<8x256xf32>
    %130 = arith.subf %129, %32 : vector<8x256xf32>
    %131 = vector.extract_strided_slice %130 {offsets = [0, 0], sizes = [8, 64], strides = [1, 1]} : vector<8x256xf32> to vector<8x64xf32>
    %132 = vector.extract_strided_slice %130 {offsets = [0, 64], sizes = [8, 64], strides = [1, 1]} : vector<8x256xf32> to vector<8x64xf32>
    %133 = vector.extract_strided_slice %130 {offsets = [0, 128], sizes = [8, 64], strides = [1, 1]} : vector<8x256xf32> to vector<8x64xf32>
    %134 = vector.extract_strided_slice %130 {offsets = [0, 192], sizes = [8, 64], strides = [1, 1]} : vector<8x256xf32> to vector<8x64xf32>
    %135 = arith.mulf %132, %116 : vector<8x64xf32>
    %136 = arith.mulf %131, %133 : vector<8x64xf32>
    %137 = arith.addf %135, %136 : vector<8x64xf32>
    %138 = math.tanh %137 : vector<8x64xf32>
    %139 = arith.mulf %134, %138 : vector<8x64xf32>
    %c5_i32 = arith.constant 5 : i32
    %140 = arith.index_cast %c5_i32 : i32 to index
    %c0_36 = arith.constant 0 : index
    %c0_37 = arith.constant 0 : index
    %141 = vector.load %arg6[%140, %c0_36, %c0_37] : memref<8x8x256xf32, #tpu.memory_space<vmem>>, vector<1x8x256xf32>
    %142 = vector.shape_cast %141 : vector<1x8x256xf32> to vector<8x256xf32>
    %cst_38 = arith.constant dense<0.000000e+00> : vector<8x256xf32>
    %143 = tpu.matmul %139, %20, %cst_38 {dimension_numbers = #tpu.dot_dimension_numbers<[1], [0], [0], [1], [0, 0, 1, 1], [], []>} : vector<8x64xf32>, vector<64x256xf32>, vector<8x256xf32> -> vector<8x256xf32>
    %144 = arith.addf %142, %143 : vector<8x256xf32>
    %145 = arith.negf %144 : vector<8x256xf32>
    %146 = math.exp %145 : vector<8x256xf32>
    %cst_39 = arith.constant 1.000000e+00 : f32
    %147 = vector.broadcast %cst_39 : f32 to vector<8x256xf32>
    %148 = arith.addf %147, %146 : vector<8x256xf32>
    %149 = arith.divf %147, %148 : vector<8x256xf32>
    %150 = arith.mulf %149, %29 : vector<8x256xf32>
    %151 = arith.subf %150, %32 : vector<8x256xf32>
    %152 = vector.extract_strided_slice %151 {offsets = [0, 0], sizes = [8, 64], strides = [1, 1]} : vector<8x256xf32> to vector<8x64xf32>
    %153 = vector.extract_strided_slice %151 {offsets = [0, 64], sizes = [8, 64], strides = [1, 1]} : vector<8x256xf32> to vector<8x64xf32>
    %154 = vector.extract_strided_slice %151 {offsets = [0, 128], sizes = [8, 64], strides = [1, 1]} : vector<8x256xf32> to vector<8x64xf32>
    %155 = vector.extract_strided_slice %151 {offsets = [0, 192], sizes = [8, 64], strides = [1, 1]} : vector<8x256xf32> to vector<8x64xf32>
    %156 = arith.mulf %153, %137 : vector<8x64xf32>
    %157 = arith.mulf %152, %154 : vector<8x64xf32>
    %158 = arith.addf %156, %157 : vector<8x64xf32>
    %159 = math.tanh %158 : vector<8x64xf32>
    %160 = arith.mulf %155, %159 : vector<8x64xf32>
    %c6_i32 = arith.constant 6 : i32
    %161 = arith.index_cast %c6_i32 : i32 to index
    %c0_40 = arith.constant 0 : index
    %c0_41 = arith.constant 0 : index
    %162 = vector.load %arg6[%161, %c0_40, %c0_41] : memref<8x8x256xf32, #tpu.memory_space<vmem>>, vector<1x8x256xf32>
    %163 = vector.shape_cast %162 : vector<1x8x256xf32> to vector<8x256xf32>
    %cst_42 = arith.constant dense<0.000000e+00> : vector<8x256xf32>
    %164 = tpu.matmul %160, %20, %cst_42 {dimension_numbers = #tpu.dot_dimension_numbers<[1], [0], [0], [1], [0, 0, 1, 1], [], []>} : vector<8x64xf32>, vector<64x256xf32>, vector<8x256xf32> -> vector<8x256xf32>
    %165 = arith.addf %163, %164 : vector<8x256xf32>
    %166 = arith.negf %165 : vector<8x256xf32>
    %167 = math.exp %166 : vector<8x256xf32>
    %cst_43 = arith.constant 1.000000e+00 : f32
    %168 = vector.broadcast %cst_43 : f32 to vector<8x256xf32>
    %169 = arith.addf %168, %167 : vector<8x256xf32>
    %170 = arith.divf %168, %169 : vector<8x256xf32>
    %171 = arith.mulf %170, %29 : vector<8x256xf32>
    %172 = arith.subf %171, %32 : vector<8x256xf32>
    %173 = vector.extract_strided_slice %172 {offsets = [0, 0], sizes = [8, 64], strides = [1, 1]} : vector<8x256xf32> to vector<8x64xf32>
    %174 = vector.extract_strided_slice %172 {offsets = [0, 64], sizes = [8, 64], strides = [1, 1]} : vector<8x256xf32> to vector<8x64xf32>
    %175 = vector.extract_strided_slice %172 {offsets = [0, 128], sizes = [8, 64], strides = [1, 1]} : vector<8x256xf32> to vector<8x64xf32>
    %176 = vector.extract_strided_slice %172 {offsets = [0, 192], sizes = [8, 64], strides = [1, 1]} : vector<8x256xf32> to vector<8x64xf32>
    %177 = arith.mulf %174, %158 : vector<8x64xf32>
    %178 = arith.mulf %173, %175 : vector<8x64xf32>
    %179 = arith.addf %177, %178 : vector<8x64xf32>
    %180 = math.tanh %179 : vector<8x64xf32>
    %181 = arith.mulf %176, %180 : vector<8x64xf32>
    %c7_i32 = arith.constant 7 : i32
    %182 = arith.index_cast %c7_i32 : i32 to index
    %c0_44 = arith.constant 0 : index
    %c0_45 = arith.constant 0 : index
    %183 = vector.load %arg6[%182, %c0_44, %c0_45] : memref<8x8x256xf32, #tpu.memory_space<vmem>>, vector<1x8x256xf32>
    %184 = vector.shape_cast %183 : vector<1x8x256xf32> to vector<8x256xf32>
    %cst_46 = arith.constant dense<0.000000e+00> : vector<8x256xf32>
    %185 = tpu.matmul %181, %20, %cst_46 {dimension_numbers = #tpu.dot_dimension_numbers<[1], [0], [0], [1], [0, 0, 1, 1], [], []>} : vector<8x64xf32>, vector<64x256xf32>, vector<8x256xf32> -> vector<8x256xf32>
    %186 = arith.addf %184, %185 : vector<8x256xf32>
    %187 = arith.negf %186 : vector<8x256xf32>
    %188 = math.exp %187 : vector<8x256xf32>
    %cst_47 = arith.constant 1.000000e+00 : f32
    %189 = vector.broadcast %cst_47 : f32 to vector<8x256xf32>
    %190 = arith.addf %189, %188 : vector<8x256xf32>
    %191 = arith.divf %189, %190 : vector<8x256xf32>
    %192 = arith.mulf %191, %29 : vector<8x256xf32>
    %193 = arith.subf %192, %32 : vector<8x256xf32>
    %194 = vector.extract_strided_slice %193 {offsets = [0, 0], sizes = [8, 64], strides = [1, 1]} : vector<8x256xf32> to vector<8x64xf32>
    %195 = vector.extract_strided_slice %193 {offsets = [0, 64], sizes = [8, 64], strides = [1, 1]} : vector<8x256xf32> to vector<8x64xf32>
    %196 = vector.extract_strided_slice %193 {offsets = [0, 128], sizes = [8, 64], strides = [1, 1]} : vector<8x256xf32> to vector<8x64xf32>
    %197 = vector.extract_strided_slice %193 {offsets = [0, 192], sizes = [8, 64], strides = [1, 1]} : vector<8x256xf32> to vector<8x64xf32>
    %198 = arith.mulf %195, %179 : vector<8x64xf32>
    %199 = arith.mulf %194, %196 : vector<8x64xf32>
    %200 = arith.addf %198, %199 : vector<8x64xf32>
    %201 = math.tanh %200 : vector<8x64xf32>
    %202 = arith.mulf %197, %201 : vector<8x64xf32>
    %c8_i32 = arith.constant 8 : i32
    %c0_48 = arith.constant 0 : index
    %c0_49 = arith.constant 0 : index
    %203 = vector.load %arg5[%c0_48, %c0_49] : memref<8x64xf32, #tpu.memory_space<vmem>>, vector<8x64xf32>
    tpu.vector_store %arg5[%c0_48, %c0_49], %202 {strides = array<i32>} : memref<8x64xf32, #tpu.memory_space<vmem>>, vector<8x64xf32>,
    return
  }
  func.func @transform_0(%arg0: i32) -> (i32, i32, i32) {
    %c0_i32 = arith.constant 0 : i32
    %c0_i32_0 = arith.constant 0 : i32
    %c0_i32_1 = arith.constant 0 : i32
    %c0_i32_2 = arith.constant 0 : i32
    return %c0_i32, %c0_i32_0, %c0_i32_1 : i32, i32, i32
  }
  func.func @transform_1(%arg0: i32) -> (i32, i32) {
    %c0_i32 = arith.constant 0 : i32
    %c0_i32_0 = arith.constant 0 : i32
    %c0_i32_1 = arith.constant 0 : i32
    return %c0_i32, %c0_i32_0 : i32, i32
  }
  func.func @transform_2(%arg0: i32) -> (i32, i32) {
    %c0_i32 = arith.constant 0 : i32
    %c0_i32_0 = arith.constant 0 : i32
    %c0_i32_1 = arith.constant 0 : i32
    return %c0_i32, %c0_i32_0 : i32, i32
  }
  func.func @transform_3(%arg0: i32) -> (i32, i32) {
    %c0_i32 = arith.constant 0 : i32
    %c0_i32_0 = arith.constant 0 : i32
    %c0_i32_1 = arith.constant 0 : i32
    return %c0_i32, %c0_i32_0 : i32, i32
  }
  func.func @transform_4(%arg0: i32) -> (i32, i32) {
    %c0_i32 = arith.constant 0 : i32
    %c0_i32_0 = arith.constant 0 : i32
    %c0_i32_1 = arith.constant 0 : i32
    return %c0_i32, %c0_i32_0 : i32, i32
  }
}

</mosaic_0001>

<llo_original>
// kernel: encoder1_forward.1
$region0: #{encoder1_forward.1}
  #allocation0 [shape = 'u32[]', space=smem, size = 0x4, offset = 0x4, fixed_abs, tag = 'smem constant byte address 0x4 - core index']
  #allocation1 [shape = 'u32[144,128]{1,0:T(1,128)}', space=vmem, size = 0x12000, scoped, tag = 'internal scratch']
  #allocation2 [shape = 'f32[8,8,256]{2,1,0:T(8,128)}', space=vmem, size = 0x10000, scoped, tag = 'scratch operand']
  %s0 = inlined_call_operand.vmem [shape: f32[8,8,2], index: 0, kind: input, shape index: {}]
  %s1 = inlined_call_operand.vmem [shape: f32[2,256], index: 1, kind: input, shape index: {}]
  %s2 = inlined_call_operand.vmem [shape: f32[1,256], index: 2, kind: input, shape index: {}]
  %s3 = inlined_call_operand.vmem [shape: f32[64,256], index: 3, kind: input, shape index: {}]
  %s4 = inlined_call_operand.hbm [shape: f32[8,64], index: 4, kind: output, shape index: {}]
  %s5 = sld [smem:[#allocation0]]
  $region26: #{encoder1_forward.1} parent=0
    _
  %s7 = ssub.s32 1, %s5
  %s8 = scalar_select 0, %s7, %s5
  $region1: #{encoder1_forward.1} parent=0
    #allocation3 [shape = 'u8[4096]{0}', space=vmem, size = 0x1000, scoped, tag = 'output window, operand 0, single buffered']
    #allocation4 [shape = 's32[1]{0}', space=sflag, size = 0x4, scoped, tag = 'scoped memory for encoder1_forward.1']
    %9 = vsyncpa [#allocation4], 0
    // Predicated region
    $region2: #{encoder1_forward.1} parent=1 // pred_check
      _
    $region3: #{encoder1_forward.1} parent=1 // pred_check_branch
      %11 = sbr.rel (0) target = $region5
    $region4: #{encoder1_forward.1} parent=1 // pred_region
      _
    $region5: #{encoder1_forward.1} parent=1 // pred_fallthru
      _
    // Predicated region
    $region6: #{encoder1_forward.1} parent=1 // pred_check
      _
    $region7: #{encoder1_forward.1} parent=1 // pred_check_branch
      %13 = sbr.rel (0) target = $region9
    $region8: #{encoder1_forward.1} parent=1 // pred_region
      _
    $region9: #{encoder1_forward.1} parent=1 // pred_fallthru
      _
    // Predicated region
    $region10: #{encoder1_forward.1} parent=1 // pred_check
      _
    $region11: #{encoder1_forward.1} parent=1 // pred_check_branch
      %15 = sbr.rel (0) target = $region13
    $region12: #{encoder1_forward.1} parent=1 // pred_region
      _
    $region13: #{encoder1_forward.1} parent=1 // pred_fallthru
      _
    // Predicated region
    $region14: #{encoder1_forward.1} parent=1 // pred_check
      _
    $region15: #{encoder1_forward.1} parent=1 // pred_check_branch
      %17 = sbr.rel (0) target = $region17
    $region16: #{encoder1_forward.1} parent=1 // pred_region
      _
    $region17: #{encoder1_forward.1} parent=1 // pred_fallthru
      _
    %v18 = vld [vmem:[%s0] sm:$0xff]
    %v19 = vld [vmem:[%s0 + $0x8] sm:$0xff]
    %v20 = vld [vmem:[%s0 + $0x10] sm:$0xff]
    %v21 = vld [vmem:[%s0 + $0x18] sm:$0xff]
    %v22 = vld [vmem:[%s0 + $0x20] sm:$0xff]
    %v23 = vld [vmem:[%s0 + $0x28] sm:$0xff]
    %v24 = vld [vmem:[%s0 + $0x30] sm:$0xff]
    %v25 = vld [vmem:[%s0 + $0x38] sm:$0xff]
    %v26 = vld [vmem:[%s1] sm:$0xf]
    %v27 = vld [vmem:[%s2] sm:$0x3]
    %29 = vset.pattern.permute.xlu0 0
    %30 = vperm.xlu0 %29, %v18
    %v31 = vpop.permute.xlu0 %30
    %34 = vset.pattern.permute.xlu0 0
    %35 = vperm.xlu0 %34, %v19
    %v36 = vpop.permute.xlu0 %35
    %39 = vset.pattern.permute.xlu0 0
    %40 = vperm.xlu0 %39, %v20
    %v41 = vpop.permute.xlu0 %40
    %44 = vset.pattern.permute.xlu0 0
    %45 = vperm.xlu0 %44, %v21
    %v46 = vpop.permute.xlu0 %45
    %49 = vset.pattern.permute.xlu0 0
    %50 = vperm.xlu0 %49, %v22
    %v51 = vpop.permute.xlu0 %50
    %54 = vset.pattern.permute.xlu0 0
    %55 = vperm.xlu0 %54, %v23
    %v56 = vpop.permute.xlu0 %55
    %59 = vset.pattern.permute.xlu0 0
    %60 = vperm.xlu0 %59, %v24
    %v61 = vpop.permute.xlu0 %60
    %64 = vset.pattern.permute.xlu0 0
    %65 = vperm.xlu0 %64, %v25
    %v66 = vpop.permute.xlu0 %65
    %v69 = vlaneseq
    %v70 = vshrl.u32 %v69, 7
    %v71 = vsub.s32 0, %v70
    %v72 = vrot.slane %v26, %v71
    %v73 = vlaneseq
    %v74 = vshrl.u32 %v73, 7
    %v75 = vsub.s32 2, %v74
    %v76 = vrot.slane %v26, %v75
    %v79 = vlaneseq
    %v80 = vshrl.u32 %v79, 7
    %v81 = vsub.s32 0, %v80
    %v82 = vrot.slane %v72, %v81
    %v83 = vlaneseq
    %v84 = vshrl.u32 %v83, 7
    %v85 = vsub.s32 0, %v84
    %v86 = vrot.slane %v76, %v85
    %v87 = vmul.f32 %v31, %v82
    %v88 = vmul.f32 %v31, %v86
    %v89 = vmul.f32 %v36, %v82
    %v90 = vmul.f32 %v36, %v86
    %v91 = vmul.f32 %v41, %v82
    %v92 = vmul.f32 %v41, %v86
    %v93 = vmul.f32 %v46, %v82
    %v94 = vmul.f32 %v46, %v86
    %v95 = vmul.f32 %v51, %v82
    %v96 = vmul.f32 %v51, %v86
    %v97 = vmul.f32 %v56, %v82
    %v98 = vmul.f32 %v56, %v86
    %v99 = vmul.f32 %v61, %v82
    %v100 = vmul.f32 %v61, %v86
    %v101 = vmul.f32 %v66, %v82
    %v102 = vmul.f32 %v66, %v86
    %103 = vset.pattern.permute.xlu0 1
    %104 = vperm.xlu0 %103, %v18
    %v105 = vpop.permute.xlu0 %104
    %107 = vset.pattern.permute.xlu0 1
    %108 = vperm.xlu0 %107, %v19
    %v109 = vpop.permute.xlu0 %108
    %111 = vset.pattern.permute.xlu0 1
    %112 = vperm.xlu0 %111, %v20
    %v113 = vpop.permute.xlu0 %112
    %115 = vset.pattern.permute.xlu0 1
    %116 = vperm.xlu0 %115, %v21
    %v117 = vpop.permute.xlu0 %116
    %119 = vset.pattern.permute.xlu0 1
    %120 = vperm.xlu0 %119, %v22
    %v121 = vpop.permute.xlu0 %120
    %123 = vset.pattern.permute.xlu0 1
    %124 = vperm.xlu0 %123, %v23
    %v125 = vpop.permute.xlu0 %124
    %127 = vset.pattern.permute.xlu0 1
    %128 = vperm.xlu0 %127, %v24
    %v129 = vpop.permute.xlu0 %128
    %131 = vset.pattern.permute.xlu0 1
    %132 = vperm.xlu0 %131, %v25
    %v133 = vpop.permute.xlu0 %132
    %v135 = vlaneseq
    %v136 = vshrl.u32 %v135, 7
    %v137 = vsub.s32 1, %v136
    %v138 = vrot.slane %v26, %v137
    %v139 = vlaneseq
    %v140 = vshrl.u32 %v139, 7
    %v141 = vsub.s32 3, %v140
    %v142 = vrot.slane %v26, %v141
    %v145 = vlaneseq
    %v146 = vshrl.u32 %v145, 7
    %v147 = vsub.s32 1, %v146
    %v148 = vrot.slane %v138, %v147
    %v149 = vlaneseq
    %v150 = vshrl.u32 %v149, 7
    %v151 = vsub.s32 1, %v150
    %v152 = vrot.slane %v142, %v151
    %v153 = vmul.f32 %v105, %v148
    %v154 = vmul.f32 %v105, %v152
    %v155 = vmul.f32 %v109, %v148
    %v156 = vmul.f32 %v109, %v152
    %v157 = vmul.f32 %v113, %v148
    %v158 = vmul.f32 %v113, %v152
    %v159 = vmul.f32 %v117, %v148
    %v160 = vmul.f32 %v117, %v152
    %v161 = vmul.f32 %v121, %v148
    %v162 = vmul.f32 %v121, %v152
    %v163 = vmul.f32 %v125, %v148
    %v164 = vmul.f32 %v125, %v152
    %v165 = vmul.f32 %v129, %v148
    %v166 = vmul.f32 %v129, %v152
    %v167 = vmul.f32 %v133, %v148
    %v168 = vmul.f32 %v133, %v152
    %v169 = vadd.f32 %v87, %v153
    %v170 = vadd.f32 %v88, %v154
    %v171 = vadd.f32 %v89, %v155
    %v172 = vadd.f32 %v90, %v156
    %v173 = vadd.f32 %v91, %v157
    %v174 = vadd.f32 %v92, %v158
    %v175 = vadd.f32 %v93, %v159
    %v176 = vadd.f32 %v94, %v160
    %v177 = vadd.f32 %v95, %v161
    %v178 = vadd.f32 %v96, %v162
    %v179 = vadd.f32 %v97, %v163
    %v180 = vadd.f32 %v98, %v164
    %v181 = vadd.f32 %v99, %v165
    %v182 = vadd.f32 %v100, %v166
    %v183 = vadd.f32 %v101, %v167
    %v184 = vadd.f32 %v102, %v168
    %v186 = vlaneseq
    %v187 = vshrl.u32 %v186, 7
    %v188 = vsub.s32 0, %v187
    %v189 = vrot.slane %v27, %v188
    %v190 = vlaneseq
    %v191 = vshrl.u32 %v190, 7
    %v192 = vsub.s32 1, %v191
    %v193 = vrot.slane %v27, %v192
    %v196 = vadd.f32 %v169, %v189
    %v197 = vadd.f32 %v170, %v193
    %v198 = vadd.f32 %v171, %v189
    %v199 = vadd.f32 %v172, %v193
    %v200 = vadd.f32 %v173, %v189
    %v201 = vadd.f32 %v174, %v193
    %v202 = vadd.f32 %v175, %v189
    %v203 = vadd.f32 %v176, %v193
    %v204 = vadd.f32 %v177, %v189
    %v205 = vadd.f32 %v178, %v193
    %v206 = vadd.f32 %v179, %v189
    %v207 = vadd.f32 %v180, %v193
    %v208 = vadd.f32 %v181, %v189
    %v209 = vadd.f32 %v182, %v193
    %v210 = vadd.f32 %v183, %v189
    %v211 = vadd.f32 %v184, %v193
    %212 = vst [vmem:[#allocation2] sm:$0xff] %v196
    %213 = vst [vmem:[#allocation2 + $0x8] sm:$0xff] %v197
    %214 = vst [vmem:[#allocation2 + $0x10] sm:$0xff] %v198
    %215 = vst [vmem:[#allocation2 + $0x18] sm:$0xff] %v199
    %216 = vst [vmem:[#allocation2 + $0x20] sm:$0xff] %v200
    %217 = vst [vmem:[#allocation2 + $0x28] sm:$0xff] %v201
    %218 = vst [vmem:[#allocation2 + $0x30] sm:$0xff] %v202
    %219 = vst [vmem:[#allocation2 + $0x38] sm:$0xff] %v203
    %220 = vst [vmem:[#allocation2 + $0x40] sm:$0xff] %v204
    %221 = vst [vmem:[#allocation2 + $0x48] sm:$0xff] %v205
    %222 = vst [vmem:[#allocation2 + $0x50] sm:$0xff] %v206
    %223 = vst [vmem:[#allocation2 + $0x58] sm:$0xff] %v207
    %224 = vst [vmem:[#allocation2 + $0x60] sm:$0xff] %v208
    %225 = vst [vmem:[#allocation2 + $0x68] sm:$0xff] %v209
    %226 = vst [vmem:[#allocation2 + $0x70] sm:$0xff] %v210
    %227 = vst [vmem:[#allocation2 + $0x78] sm:$0xff] %v211
    %v228 = vld [vmem:[%s3] sm:$0xff]
    %v229 = vld [vmem:[%s3 + $0x8] sm:$0xff]
    %v230 = vld [vmem:[%s3 + $0x10] sm:$0xff]
    %v231 = vld [vmem:[%s3 + $0x18] sm:$0xff]
    %v232 = vld [vmem:[%s3 + $0x20] sm:$0xff]
    %v233 = vld [vmem:[%s3 + $0x28] sm:$0xff]
    %v234 = vld [vmem:[%s3 + $0x30] sm:$0xff]
    %v235 = vld [vmem:[%s3 + $0x38] sm:$0xff]
    %v236 = vld [vmem:[%s3 + $0x40] sm:$0xff]
    %v237 = vld [vmem:[%s3 + $0x48] sm:$0xff]
    %v238 = vld [vmem:[%s3 + $0x50] sm:$0xff]
    %v239 = vld [vmem:[%s3 + $0x58] sm:$0xff]
    %v240 = vld [vmem:[%s3 + $0x60] sm:$0xff]
    %v241 = vld [vmem:[%s3 + $0x68] sm:$0xff]
    %v242 = vld [vmem:[%s3 + $0x70] sm:$0xff]
    %v243 = vld [vmem:[%s3 + $0x78] sm:$0xff]
    %v244 = vlaneseq
    %v245 = vand.u32 %v244, 127
    %v246 = vadd.s32 %v245, 128
    %vm247 = vcmp.ge.s32.totalorder %v245, 128
    %vm248 = vcmp.ge.s32.totalorder %v246, 128
    %vm249 = vcmp.lt.s32.totalorder %v245, 192
    %vm250 = vcmp.lt.s32.totalorder %v246, 192
    %vm251 = vmand %vm247, %vm249
    %vm252 = vmand %vm248, %vm250
    %v253 = vsel %vm251, 2.0, 1.0
    %v254 = vsel %vm252, 2.0, 1.0
    %v255 = vsel %vm251, 1.0, 0.0
    %v256 = vsel %vm252, 1.0, 0.0
    %v257 = vld [vmem:[#allocation2] sm:$0xff]
    %v258 = vld [vmem:[#allocation2 + $0x8] sm:$0xff]
    %vm259 = vcmask 523264
    %v261 = vsel %vm259, 0.0, 0
    %263 = vmatprep.subr.mxu0 %v229
    %264 = vmatpush1.msra.mxu0 %v228
    %265 = vmatprep.subr.mxu0 %v231
    %266 = vmatpush1.msra.mxu0 %v230
    %267 = vmatprep.subr.mxu0 %v233
    %268 = vmatpush1.msra.mxu0 %v232
    %269 = vmatprep.subr.mxu0 %v235
    %270 = vmatpush1.msra.mxu0 %v234
    %271 = vmatprep.subr.mxu0 %v237
    %272 = vmatpush1.msra.mxu0 %v236
    %273 = vmatprep.subr.mxu0 %v239
    %274 = vmatpush1.msra.mxu0 %v238
    %275 = vmatprep.subr.mxu0 %v241
    %276 = vmatpush1.msra.mxu0 %v240
    %277 = vmatprep.subr.mxu0 %v243
    %278 = vmatpush1.msra.mxu0 %v242
    %279 = vmatprep.subr.mxu0 0.0
    %280 = vmatpush1.msra.mxu0 0.0
    %281 = vmatprep.subr.mxu0 0.0
    %282 = vmatpush1.msra.mxu0 0.0
    %283 = vmatprep.subr.mxu0 0.0
    %284 = vmatpush1.msra.mxu0 0.0
    %285 = vmatprep.subr.mxu0 0.0
    %286 = vmatpush1.msra.mxu0 0.0
    %287 = vmatprep.subr.mxu0 0.0
    %288 = vmatpush1.msra.mxu0 0.0
    %289 = vmatprep.subr.mxu0 0.0
    %290 = vmatpush1.msra.mxu0 0.0
    %291 = vmatprep.subr.mxu0 0.0
    %292 = vmatpush1.msra.mxu0 0.0
    %293 = vmatprep.subr.mxu0 0.0
    %294 = vmatpush1.msra.mxu0 0.0
    %295 = vmatprep.subr.mxu0 0.0
    %296 = vmatpush1.msra.mxu0 0.0
    %297 = vmatprep.subr.mxu0 0.0
    %298 = vmatpush1.msra.mxu0 0.0
    %299 = vmatprep.subr.mxu0 0.0
    %300 = vmatpush1.msra.mxu0 0.0
    %301 = vmatprep.subr.mxu0 0.0
    %302 = vmatpush1.msra.mxu0 0.0
    %303 = vmatprep.subr.mxu0 0.0
    %304 = vmatpush1.msra.mxu0 0.0
    %305 = vmatprep.subr.mxu0 0.0
    %306 = vmatpush1.msra.mxu0 0.0
    %307 = vmatprep.subr.mxu0 0.0
    %308 = vmatpush1.msra.mxu0 0.0
    %309 = vmatprep.subr.mxu0 0.0
    %310 = vmatpush1.msra.mxu0 0.0
    %311 = vmatprep.subr.mxu0 0.0
    %312 = vmatpush1.msra.mxu0 0.0
    %313 = vmatprep.subr.mxu0 0.0
    %314 = vmatpush1.msra.mxu0 0.0
    %315 = vmatprep.subr.mxu0 0.0
    %316 = vmatpush1.msra.mxu0 0.0
    %317 = vmatprep.subr.mxu0 0.0
    %318 = vmatpush1.msra.mxu0 0.0
    %319 = vmatprep.subr.mxu0 0.0
    %320 = vmatpush1.msra.mxu0 0.0
    %321 = vmatprep.subr.mxu0 0.0
    %322 = vmatpush1.msra.mxu0 0.0
    %323 = vmatprep.subr.mxu0 0.0
    %324 = vmatpush1.msra.mxu0 0.0
    %325 = vmatprep.subr.mxu0 0.0
    %326 = vmatpush1.msra.mxu0 0.0
    %327 = vmatprep.mubr.f32.mxu0 0.0
    %328 = vmatmul.mubr.f32.gmra.mrb[0].mxu0 %v261
    %v329 = vpop.f32.mrb[0].mxu0
    %v330 = vadd.f32 0.0, %v329
    %v331 = vpop.f32.mrb[0].mxu0
    %v332 = vadd.f32 0.0, %v331
    %333 = vdwg.mxu0
    %v334 = vadd.f32 %v257, %v330
    %v335 = vadd.f32 %v258, %v332
    %v336 = vxor.u32 %v334, 2147483648
    %v337 = vxor.u32 %v335, 2147483648
    %v338 = vmul.f32 %v336, 1.442695
    %v339 = vpow.pop %v338
    %v340 = vmul.f32 %v337, 1.442695
    %v341 = vpow.pop %v340
    %v342 = vadd.f32 %v339, 1.0
    %v343 = vadd.f32 %v341, 1.0
    %v344 = vrcp.pop %v342
    %v345 = vmul.f32 1.0, %v344
    %v346 = vrcp.pop %v343
    %v347 = vmul.f32 1.0, %v346
    %v348 = vmul.f32 %v345, %v253
    %v349 = vmul.f32 %v347, %v254
    %v350 = vsub.f32 %v348, %v255
    %v351 = vsub.f32 %v349, %v256
    %v352 = vmul.f32 %v350, 0.0
    %v353 = vmul.f32 %v350, %v351
    %355 = vrot.lane.b32.xlu0 %v353, 64
    %v356 = vpop.permute.xlu0 %355
    %v358 = vadd.f32 %v352, %v356
    %v359 = vtanh.pop %v358
    %v360 = vmul.f32 %v351, %v359
    %s361 = scalar_lea.vmem [#allocation2], 16
    %v362 = vld [vmem:[%s361] sm:$0xff]
    %v363 = vld [vmem:[%s361 + $0x8] sm:$0xff]
    %365 = vrot.lane.b32.xlu0 %v360, 64
    %v366 = vpop.permute.xlu0 %365
    %v367 = vsel %vm259, %v366, 0
    %369 = vmatprep.subr.mxu0 %v229
    %370 = vmatpush1.msra.mxu0 %v228
    %371 = vmatprep.subr.mxu0 %v231
    %372 = vmatpush1.msra.mxu0 %v230
    %373 = vmatprep.subr.mxu0 %v233
    %374 = vmatpush1.msra.mxu0 %v232
    %375 = vmatprep.subr.mxu0 %v235
    %376 = vmatpush1.msra.mxu0 %v234
    %377 = vmatprep.subr.mxu0 %v237
    %378 = vmatpush1.msra.mxu0 %v236
    %379 = vmatprep.subr.mxu0 %v239
    %380 = vmatpush1.msra.mxu0 %v238
    %381 = vmatprep.subr.mxu0 %v241
    %382 = vmatpush1.msra.mxu0 %v240
    %383 = vmatprep.subr.mxu0 %v243
    %384 = vmatpush1.msra.mxu0 %v242
    %385 = vmatprep.subr.mxu0 0.0
    %386 = vmatpush1.msra.mxu0 0.0
    %387 = vmatprep.subr.mxu0 0.0
    %388 = vmatpush1.msra.mxu0 0.0
    %389 = vmatprep.subr.mxu0 0.0
    %390 = vmatpush1.msra.mxu0 0.0
    %391 = vmatprep.subr.mxu0 0.0
    %392 = vmatpush1.msra.mxu0 0.0
    %393 = vmatprep.subr.mxu0 0.0
    %394 = vmatpush1.msra.mxu0 0.0
    %395 = vmatprep.subr.mxu0 0.0
    %396 = vmatpush1.msra.mxu0 0.0
    %397 = vmatprep.subr.mxu0 0.0
    %398 = vmatpush1.msra.mxu0 0.0
    %399 = vmatprep.subr.mxu0 0.0
    %400 = vmatpush1.msra.mxu0 0.0
    %401 = vmatprep.subr.mxu0 0.0
    %402 = vmatpush1.msra.mxu0 0.0
    %403 = vmatprep.subr.mxu0 0.0
    %404 = vmatpush1.msra.mxu0 0.0
    %405 = vmatprep.subr.mxu0 0.0
    %406 = vmatpush1.msra.mxu0 0.0
    %407 = vmatprep.subr.mxu0 0.0
    %408 = vmatpush1.msra.mxu0 0.0
    %409 = vmatprep.subr.mxu0 0.0
    %410 = vmatpush1.msra.mxu0 0.0
    %411 = vmatprep.subr.mxu0 0.0
    %412 = vmatpush1.msra.mxu0 0.0
    %413 = vmatprep.subr.mxu0 0.0
    %414 = vmatpush1.msra.mxu0 0.0
    %415 = vmatprep.subr.mxu0 0.0
    %416 = vmatpush1.msra.mxu0 0.0
    %417 = vmatprep.subr.mxu0 0.0
    %418 = vmatpush1.msra.mxu0 0.0
    %419 = vmatprep.subr.mxu0 0.0
    %420 = vmatpush1.msra.mxu0 0.0
    %421 = vmatprep.subr.mxu0 0.0
    %422 = vmatpush1.msra.mxu0 0.0
    %423 = vmatprep.subr.mxu0 0.0
    %424 = vmatpush1.msra.mxu0 0.0
    %425 = vmatprep.subr.mxu0 0.0
    %426 = vmatpush1.msra.mxu0 0.0
    %427 = vmatprep.subr.mxu0 0.0
    %428 = vmatpush1.msra.mxu0 0.0
    %429 = vmatprep.subr.mxu0 0.0
    %430 = vmatpush1.msra.mxu0 0.0
    %431 = vmatprep.subr.mxu0 0.0
    %432 = vmatpush1.msra.mxu0 0.0
    %433 = vmatprep.mubr.f32.mxu0 0.0
    %434 = vmatmul.mubr.f32.gmra.mrb[0].mxu0 %v367
    %v435 = vpop.f32.mrb[0].mxu0
    %v436 = vadd.f32 0.0, %v435
    %v437 = vpop.f32.mrb[0].mxu0
    %v438 = vadd.f32 0.0, %v437
    %439 = vdwg.mxu0
    %v440 = vadd.f32 %v362, %v436
    %v441 = vadd.f32 %v363, %v438
    %v442 = vxor.u32 %v440, 2147483648
    %v443 = vxor.u32 %v441, 2147483648
    %v444 = vmul.f32 %v442, 1.442695
    %v445 = vpow.pop %v444
    %v446 = vmul.f32 %v443, 1.442695
    %v447 = vpow.pop %v446
    %v448 = vadd.f32 %v445, 1.0
    %v449 = vadd.f32 %v447, 1.0
    %v450 = vrcp.pop %v448
    %v451 = vmul.f32 1.0, %v450
    %v452 = vrcp.pop %v449
    %v453 = vmul.f32 1.0, %v452
    %v454 = vmul.f32 %v451, %v253
    %v455 = vmul.f32 %v453, %v254
    %v456 = vsub.f32 %v454, %v255
    %v457 = vsub.f32 %v455, %v256
    %v458 = vmul.f32 %v456, %v358
    %v459 = vmul.f32 %v456, %v457
    %461 = vrot.lane.b32.xlu0 %v459, 64
    %v462 = vpop.permute.xlu0 %461
    %v464 = vadd.f32 %v458, %v462
    %v465 = vtanh.pop %v464
    %v466 = vmul.f32 %v457, %v465
    %s467 = scalar_lea.vmem [#allocation2], 32
    %v468 = vld [vmem:[%s467] sm:$0xff]
    %v469 = vld [vmem:[%s467 + $0x8] sm:$0xff]
    %471 = vrot.lane.b32.xlu0 %v466, 64
    %v472 = vpop.permute.xlu0 %471
    %v473 = vsel %vm259, %v472, 0
    %475 = vmatprep.subr.mxu0 %v229
    %476 = vmatpush1.msra.mxu0 %v228
    %477 = vmatprep.subr.mxu0 %v231
    %478 = vmatpush1.msra.mxu0 %v230
    %479 = vmatprep.subr.mxu0 %v233
    %480 = vmatpush1.msra.mxu0 %v232
    %481 = vmatprep.subr.mxu0 %v235
    %482 = vmatpush1.msra.mxu0 %v234
    %483 = vmatprep.subr.mxu0 %v237
    %484 = vmatpush1.msra.mxu0 %v236
    %485 = vmatprep.subr.mxu0 %v239
    %486 = vmatpush1.msra.mxu0 %v238
    %487 = vmatprep.subr.mxu0 %v241
    %488 = vmatpush1.msra.mxu0 %v240
    %489 = vmatprep.subr.mxu0 %v243
    %490 = vmatpush1.msra.mxu0 %v242
    %491 = vmatprep.subr.mxu0 0.0
    %492 = vmatpush1.msra.mxu0 0.0
    %493 = vmatprep.subr.mxu0 0.0
    %494 = vmatpush1.msra.mxu0 0.0
    %495 = vmatprep.subr.mxu0 0.0
    %496 = vmatpush1.msra.mxu0 0.0
    %497 = vmatprep.subr.mxu0 0.0
    %498 = vmatpush1.msra.mxu0 0.0
    %499 = vmatprep.subr.mxu0 0.0
    %500 = vmatpush1.msra.mxu0 0.0
    %501 = vmatprep.subr.mxu0 0.0
    %502 = vmatpush1.msra.mxu0 0.0
    %503 = vmatprep.subr.mxu0 0.0
    %504 = vmatpush1.msra.mxu0 0.0
    %505 = vmatprep.subr.mxu0 0.0
    %506 = vmatpush1.msra.mxu0 0.0
    %507 = vmatprep.subr.mxu0 0.0
    %508 = vmatpush1.msra.mxu0 0.0
    %509 = vmatprep.subr.mxu0 0.0
    %510 = vmatpush1.msra.mxu0 0.0
    %511 = vmatprep.subr.mxu0 0.0
    %512 = vmatpush1.msra.mxu0 0.0
    %513 = vmatprep.subr.mxu0 0.0
    %514 = vmatpush1.msra.mxu0 0.0
    %515 = vmatprep.subr.mxu0 0.0
    %516 = vmatpush1.msra.mxu0 0.0
    %517 = vmatprep.subr.mxu0 0.0
    %518 = vmatpush1.msra.mxu0 0.0
    %519 = vmatprep.subr.mxu0 0.0
    %520 = vmatpush1.msra.mxu0 0.0
    %521 = vmatprep.subr.mxu0 0.0
    %522 = vmatpush1.msra.mxu0 0.0
    %523 = vmatprep.subr.mxu0 0.0
    %524 = vmatpush1.msra.mxu0 0.0
    %525 = vmatprep.subr.mxu0 0.0
    %526 = vmatpush1.msra.mxu0 0.0
    %527 = vmatprep.subr.mxu0 0.0
    %528 = vmatpush1.msra.mxu0 0.0
    %529 = vmatprep.subr.mxu0 0.0
    %530 = vmatpush1.msra.mxu0 0.0
    %531 = vmatprep.subr.mxu0 0.0
    %532 = vmatpush1.msra.mxu0 0.0
    %533 = vmatprep.subr.mxu0 0.0
    %534 = vmatpush1.msra.mxu0 0.0
    %535 = vmatprep.subr.mxu0 0.0
    %536 = vmatpush1.msra.mxu0 0.0
    %537 = vmatprep.subr.mxu0 0.0
    %538 = vmatpush1.msra.mxu0 0.0
    %539 = vmatprep.mubr.f32.mxu0 0.0
    %540 = vmatmul.mubr.f32.gmra.mrb[0].mxu0 %v473
    %v541 = vpop.f32.mrb[0].mxu0
    %v542 = vadd.f32 0.0, %v541
    %v543 = vpop.f32.mrb[0].mxu0
    %v544 = vadd.f32 0.0, %v543
    %545 = vdwg.mxu0
    %v546 = vadd.f32 %v468, %v542
    %v547 = vadd.f32 %v469, %v544
    %v548 = vxor.u32 %v546, 2147483648
    %v549 = vxor.u32 %v547, 2147483648
    %v550 = vmul.f32 %v548, 1.442695
    %v551 = vpow.pop %v550
    %v552 = vmul.f32 %v549, 1.442695
    %v553 = vpow.pop %v552
    %v554 = vadd.f32 %v551, 1.0
    %v555 = vadd.f32 %v553, 1.0
    %v556 = vrcp.pop %v554
    %v557 = vmul.f32 1.0, %v556
    %v558 = vrcp.pop %v555
    %v559 = vmul.f32 1.0, %v558
    %v560 = vmul.f32 %v557, %v253
    %v561 = vmul.f32 %v559, %v254
    %v562 = vsub.f32 %v560, %v255
    %v563 = vsub.f32 %v561, %v256
    %v564 = vmul.f32 %v562, %v464
    %v565 = vmul.f32 %v562, %v563
    %567 = vrot.lane.b32.xlu0 %v565, 64
    %v568 = vpop.permute.xlu0 %567
    %v570 = vadd.f32 %v564, %v568
    %v571 = vtanh.pop %v570
    %v572 = vmul.f32 %v563, %v571
    %s573 = scalar_lea.vmem [#allocation2], 48
    %v574 = vld [vmem:[%s573] sm:$0xff]
    %v575 = vld [vmem:[%s573 + $0x8] sm:$0xff]
    %577 = vrot.lane.b32.xlu0 %v572, 64
    %v578 = vpop.permute.xlu0 %577
    %v579 = vsel %vm259, %v578, 0
    %581 = vmatprep.subr.mxu0 %v229
    %582 = vmatpush1.msra.mxu0 %v228
    %583 = vmatprep.subr.mxu0 %v231
    %584 = vmatpush1.msra.mxu0 %v230
    %585 = vmatprep.subr.mxu0 %v233
    %586 = vmatpush1.msra.mxu0 %v232
    %587 = vmatprep.subr.mxu0 %v235
    %588 = vmatpush1.msra.mxu0 %v234
    %589 = vmatprep.subr.mxu0 %v237
    %590 = vmatpush1.msra.mxu0 %v236
    %591 = vmatprep.subr.mxu0 %v239
    %592 = vmatpush1.msra.mxu0 %v238
    %593 = vmatprep.subr.mxu0 %v241
    %594 = vmatpush1.msra.mxu0 %v240
    %595 = vmatprep.subr.mxu0 %v243
    %596 = vmatpush1.msra.mxu0 %v242
    %597 = vmatprep.subr.mxu0 0.0
    %598 = vmatpush1.msra.mxu0 0.0
    %599 = vmatprep.subr.mxu0 0.0
    %600 = vmatpush1.msra.mxu0 0.0
    %601 = vmatprep.subr.mxu0 0.0
    %602 = vmatpush1.msra.mxu0 0.0
    %603 = vmatprep.subr.mxu0 0.0
    %604 = vmatpush1.msra.mxu0 0.0
    %605 = vmatprep.subr.mxu0 0.0
    %606 = vmatpush1.msra.mxu0 0.0
    %607 = vmatprep.subr.mxu0 0.0
    %608 = vmatpush1.msra.mxu0 0.0
    %609 = vmatprep.subr.mxu0 0.0
    %610 = vmatpush1.msra.mxu0 0.0
    %611 = vmatprep.subr.mxu0 0.0
    %612 = vmatpush1.msra.mxu0 0.0
    %613 = vmatprep.subr.mxu0 0.0
    %614 = vmatpush1.msra.mxu0 0.0
    %615 = vmatprep.subr.mxu0 0.0
    %616 = vmatpush1.msra.mxu0 0.0
    %617 = vmatprep.subr.mxu0 0.0
    %618 = vmatpush1.msra.mxu0 0.0
    %619 = vmatprep.subr.mxu0 0.0
    %620 = vmatpush1.msra.mxu0 0.0
    %621 = vmatprep.subr.mxu0 0.0
    %622 = vmatpush1.msra.mxu0 0.0
    %623 = vmatprep.subr.mxu0 0.0
    %624 = vmatpush1.msra.mxu0 0.0
    %625 = vmatprep.subr.mxu0 0.0
    %626 = vmatpush1.msra.mxu0 0.0
    %627 = vmatprep.subr.mxu0 0.0
    %628 = vmatpush1.msra.mxu0 0.0
    %629 = vmatprep.subr.mxu0 0.0
    %630 = vmatpush1.msra.mxu0 0.0
    %631 = vmatprep.subr.mxu0 0.0
    %632 = vmatpush1.msra.mxu0 0.0
    %633 = vmatprep.subr.mxu0 0.0
    %634 = vmatpush1.msra.mxu0 0.0
    %635 = vmatprep.subr.mxu0 0.0
    %636 = vmatpush1.msra.mxu0 0.0
    %637 = vmatprep.subr.mxu0 0.0
    %638 = vmatpush1.msra.mxu0 0.0
    %639 = vmatprep.subr.mxu0 0.0
    %640 = vmatpush1.msra.mxu0 0.0
    %641 = vmatprep.subr.mxu0 0.0
    %642 = vmatpush1.msra.mxu0 0.0
    %643 = vmatprep.subr.mxu0 0.0
    %644 = vmatpush1.msra.mxu0 0.0
    %645 = vmatprep.mubr.f32.mxu0 0.0
    %646 = vmatmul.mubr.f32.gmra.mrb[0].mxu0 %v579
    %v647 = vpop.f32.mrb[0].mxu0
    %v648 = vadd.f32 0.0, %v647
    %v649 = vpop.f32.mrb[0].mxu0
    %v650 = vadd.f32 0.0, %v649
    %651 = vdwg.mxu0
    %v652 = vadd.f32 %v574, %v648
    %v653 = vadd.f32 %v575, %v650
    %v654 = vxor.u32 %v652, 2147483648
    %v655 = vxor.u32 %v653, 2147483648
    %v656 = vmul.f32 %v654, 1.442695
    %v657 = vpow.pop %v656
    %v658 = vmul.f32 %v655, 1.442695
    %v659 = vpow.pop %v658
    %v660 = vadd.f32 %v657, 1.0
    %v661 = vadd.f32 %v659, 1.0
    %v662 = vrcp.pop %v660
    %v663 = vmul.f32 1.0, %v662
    %v664 = vrcp.pop %v661
    %v665 = vmul.f32 1.0, %v664
    %v666 = vmul.f32 %v663, %v253
    %v667 = vmul.f32 %v665, %v254
    %v668 = vsub.f32 %v666, %v255
    %v669 = vsub.f32 %v667, %v256
    %v670 = vmul.f32 %v668, %v570
    %v671 = vmul.f32 %v668, %v669
    %673 = vrot.lane.b32.xlu0 %v671, 64
    %v674 = vpop.permute.xlu0 %673
    %v676 = vadd.f32 %v670, %v674
    %v677 = vtanh.pop %v676
    %v678 = vmul.f32 %v669, %v677
    %s679 = scalar_lea.vmem [#allocation2], 64
    %v680 = vld [vmem:[%s679] sm:$0xff]
    %v681 = vld [vmem:[%s679 + $0x8] sm:$0xff]
    %683 = vrot.lane.b32.xlu0 %v678, 64
    %v684 = vpop.permute.xlu0 %683
    %v685 = vsel %vm259, %v684, 0
    %687 = vmatprep.subr.mxu0 %v229
    %688 = vmatpush1.msra.mxu0 %v228
    %689 = vmatprep.subr.mxu0 %v231
    %690 = vmatpush1.msra.mxu0 %v230
    %691 = vmatprep.subr.mxu0 %v233
    %692 = vmatpush1.msra.mxu0 %v232
    %693 = vmatprep.subr.mxu0 %v235
    %694 = vmatpush1.msra.mxu0 %v234
    %695 = vmatprep.subr.mxu0 %v237
    %696 = vmatpush1.msra.mxu0 %v236
    %697 = vmatprep.subr.mxu0 %v239
    %698 = vmatpush1.msra.mxu0 %v238
    %699 = vmatprep.subr.mxu0 %v241
    %700 = vmatpush1.msra.mxu0 %v240
    %701 = vmatprep.subr.mxu0 %v243
    %702 = vmatpush1.msra.mxu0 %v242
    %703 = vmatprep.subr.mxu0 0.0
    %704 = vmatpush1.msra.mxu0 0.0
    %705 = vmatprep.subr.mxu0 0.0
    %706 = vmatpush1.msra.mxu0 0.0
    %707 = vmatprep.subr.mxu0 0.0
    %708 = vmatpush1.msra.mxu0 0.0
    %709 = vmatprep.subr.mxu0 0.0
    %710 = vmatpush1.msra.mxu0 0.0
    %711 = vmatprep.subr.mxu0 0.0
    %712 = vmatpush1.msra.mxu0 0.0
    %713 = vmatprep.subr.mxu0 0.0
    %714 = vmatpush1.msra.mxu0 0.0
    %715 = vmatprep.subr.mxu0 0.0
    %716 = vmatpush1.msra.mxu0 0.0
    %717 = vmatprep.subr.mxu0 0.0
    %718 = vmatpush1.msra.mxu0 0.0
    %719 = vmatprep.subr.mxu0 0.0
    %720 = vmatpush1.msra.mxu0 0.0
    %721 = vmatprep.subr.mxu0 0.0
    %722 = vmatpush1.msra.mxu0 0.0
    %723 = vmatprep.subr.mxu0 0.0
    %724 = vmatpush1.msra.mxu0 0.0
    %725 = vmatprep.subr.mxu0 0.0
    %726 = vmatpush1.msra.mxu0 0.0
    %727 = vmatprep.subr.mxu0 0.0
    %728 = vmatpush1.msra.mxu0 0.0
    %729 = vmatprep.subr.mxu0 0.0
    %730 = vmatpush1.msra.mxu0 0.0
    %731 = vmatprep.subr.mxu0 0.0
    %732 = vmatpush1.msra.mxu0 0.0
    %733 = vmatprep.subr.mxu0 0.0
    %734 = vmatpush1.msra.mxu0 0.0
    %735 = vmatprep.subr.mxu0 0.0
    %736 = vmatpush1.msra.mxu0 0.0
    %737 = vmatprep.subr.mxu0 0.0
    %738 = vmatpush1.msra.mxu0 0.0
    %739 = vmatprep.subr.mxu0 0.0
    %740 = vmatpush1.msra.mxu0 0.0
    %741 = vmatprep.subr.mxu0 0.0
    %742 = vmatpush1.msra.mxu0 0.0
    %743 = vmatprep.subr.mxu0 0.0
    %744 = vmatpush1.msra.mxu0 0.0
    %745 = vmatprep.subr.mxu0 0.0
    %746 = vmatpush1.msra.mxu0 0.0
    %747 = vmatprep.subr.mxu0 0.0
    %748 = vmatpush1.msra.mxu0 0.0
    %749 = vmatprep.subr.mxu0 0.0
    %750 = vmatpush1.msra.mxu0 0.0
    %751 = vmatprep.mubr.f32.mxu0 0.0
    %752 = vmatmul.mubr.f32.gmra.mrb[0].mxu0 %v685
    %v753 = vpop.f32.mrb[0].mxu0
    %v754 = vadd.f32 0.0, %v753
    %v755 = vpop.f32.mrb[0].mxu0
    %v756 = vadd.f32 0.0, %v755
    %757 = vdwg.mxu0
    %v758 = vadd.f32 %v680, %v754
    %v759 = vadd.f32 %v681, %v756
    %v760 = vxor.u32 %v758, 2147483648
    %v761 = vxor.u32 %v759, 2147483648
    %v762 = vmul.f32 %v760, 1.442695
    %v763 = vpow.pop %v762
    %v764 = vmul.f32 %v761, 1.442695
    %v765 = vpow.pop %v764
    %v766 = vadd.f32 %v763, 1.0
    %v767 = vadd.f32 %v765, 1.0
    %v768 = vrcp.pop %v766
    %v769 = vmul.f32 1.0, %v768
    %v770 = vrcp.pop %v767
    %v771 = vmul.f32 1.0, %v770
    %v772 = vmul.f32 %v769, %v253
    %v773 = vmul.f32 %v771, %v254
    %v774 = vsub.f32 %v772, %v255
    %v775 = vsub.f32 %v773, %v256
    %v776 = vmul.f32 %v774, %v676
    %v777 = vmul.f32 %v774, %v775
    %779 = vrot.lane.b32.xlu0 %v777, 64
    %v780 = vpop.permute.xlu0 %779
    %v782 = vadd.f32 %v776, %v780
    %v783 = vtanh.pop %v782
    %v784 = vmul.f32 %v775, %v783
    %s785 = scalar_lea.vmem [#allocation2], 80
    %v786 = vld [vmem:[%s785] sm:$0xff]
    %v787 = vld [vmem:[%s785 + $0x8] sm:$0xff]
    %789 = vrot.lane.b32.xlu0 %v784, 64
    %v790 = vpop.permute.xlu0 %789
    %v791 = vsel %vm259, %v790, 0
    %793 = vmatprep.subr.mxu0 %v229
    %794 = vmatpush1.msra.mxu0 %v228
    %795 = vmatprep.subr.mxu0 %v231
    %796 = vmatpush1.msra.mxu0 %v230
    %797 = vmatprep.subr.mxu0 %v233
    %798 = vmatpush1.msra.mxu0 %v232
    %799 = vmatprep.subr.mxu0 %v235
    %800 = vmatpush1.msra.mxu0 %v234
    %801 = vmatprep.subr.mxu0 %v237
    %802 = vmatpush1.msra.mxu0 %v236
    %803 = vmatprep.subr.mxu0 %v239
    %804 = vmatpush1.msra.mxu0 %v238
    %805 = vmatprep.subr.mxu0 %v241
    %806 = vmatpush1.msra.mxu0 %v240
    %807 = vmatprep.subr.mxu0 %v243
    %808 = vmatpush1.msra.mxu0 %v242
    %809 = vmatprep.subr.mxu0 0.0
    %810 = vmatpush1.msra.mxu0 0.0
    %811 = vmatprep.subr.mxu0 0.0
    %812 = vmatpush1.msra.mxu0 0.0
    %813 = vmatprep.subr.mxu0 0.0
    %814 = vmatpush1.msra.mxu0 0.0
    %815 = vmatprep.subr.mxu0 0.0
    %816 = vmatpush1.msra.mxu0 0.0
    %817 = vmatprep.subr.mxu0 0.0
    %818 = vmatpush1.msra.mxu0 0.0
    %819 = vmatprep.subr.mxu0 0.0
    %820 = vmatpush1.msra.mxu0 0.0
    %821 = vmatprep.subr.mxu0 0.0
    %822 = vmatpush1.msra.mxu0 0.0
    %823 = vmatprep.subr.mxu0 0.0
    %824 = vmatpush1.msra.mxu0 0.0
    %825 = vmatprep.subr.mxu0 0.0
    %826 = vmatpush1.msra.mxu0 0.0
    %827 = vmatprep.subr.mxu0 0.0
    %828 = vmatpush1.msra.mxu0 0.0
    %829 = vmatprep.subr.mxu0 0.0
    %830 = vmatpush1.msra.mxu0 0.0
    %831 = vmatprep.subr.mxu0 0.0
    %832 = vmatpush1.msra.mxu0 0.0
    %833 = vmatprep.subr.mxu0 0.0
    %834 = vmatpush1.msra.mxu0 0.0
    %835 = vmatprep.subr.mxu0 0.0
    %836 = vmatpush1.msra.mxu0 0.0
    %837 = vmatprep.subr.mxu0 0.0
    %838 = vmatpush1.msra.mxu0 0.0
    %839 = vmatprep.subr.mxu0 0.0
    %840 = vmatpush1.msra.mxu0 0.0
    %841 = vmatprep.subr.mxu0 0.0
    %842 = vmatpush1.msra.mxu0 0.0
    %843 = vmatprep.subr.mxu0 0.0
    %844 = vmatpush1.msra.mxu0 0.0
    %845 = vmatprep.subr.mxu0 0.0
    %846 = vmatpush1.msra.mxu0 0.0
    %847 = vmatprep.subr.mxu0 0.0
    %848 = vmatpush1.msra.mxu0 0.0
    %849 = vmatprep.subr.mxu0 0.0
    %850 = vmatpush1.msra.mxu0 0.0
    %851 = vmatprep.subr.mxu0 0.0
    %852 = vmatpush1.msra.mxu0 0.0
    %853 = vmatprep.subr.mxu0 0.0
    %854 = vmatpush1.msra.mxu0 0.0
    %855 = vmatprep.subr.mxu0 0.0
    %856 = vmatpush1.msra.mxu0 0.0
    %857 = vmatprep.mubr.f32.mxu0 0.0
    %858 = vmatmul.mubr.f32.gmra.mrb[0].mxu0 %v791
    %v859 = vpop.f32.mrb[0].mxu0
    %v860 = vadd.f32 0.0, %v859
    %v861 = vpop.f32.mrb[0].mxu0
    %v862 = vadd.f32 0.0, %v861
    %863 = vdwg.mxu0
    %v864 = vadd.f32 %v786, %v860
    %v865 = vadd.f32 %v787, %v862
    %v866 = vxor.u32 %v864, 2147483648
    %v867 = vxor.u32 %v865, 2147483648
    %v868 = vmul.f32 %v866, 1.442695
    %v869 = vpow.pop %v868
    %v870 = vmul.f32 %v867, 1.442695
    %v871 = vpow.pop %v870
    %v872 = vadd.f32 %v869, 1.0
    %v873 = vadd.f32 %v871, 1.0
    %v874 = vrcp.pop %v872
    %v875 = vmul.f32 1.0, %v874
    %v876 = vrcp.pop %v873
    %v877 = vmul.f32 1.0, %v876
    %v878 = vmul.f32 %v875, %v253
    %v879 = vmul.f32 %v877, %v254
    %v880 = vsub.f32 %v878, %v255
    %v881 = vsub.f32 %v879, %v256
    %v882 = vmul.f32 %v880, %v782
    %v883 = vmul.f32 %v880, %v881
    %885 = vrot.lane.b32.xlu0 %v883, 64
    %v886 = vpop.permute.xlu0 %885
    %v888 = vadd.f32 %v882, %v886
    %v889 = vtanh.pop %v888
    %v890 = vmul.f32 %v881, %v889
    %s891 = scalar_lea.vmem [#allocation2], 96
    %v892 = vld [vmem:[%s891] sm:$0xff]
    %v893 = vld [vmem:[%s891 + $0x8] sm:$0xff]
    %895 = vrot.lane.b32.xlu0 %v890, 64
    %v896 = vpop.permute.xlu0 %895
    %v897 = vsel %vm259, %v896, 0
    %899 = vmatprep.subr.mxu0 %v229
    %900 = vmatpush1.msra.mxu0 %v228
    %901 = vmatprep.subr.mxu0 %v231
    %902 = vmatpush1.msra.mxu0 %v230
    %903 = vmatprep.subr.mxu0 %v233
    %904 = vmatpush1.msra.mxu0 %v232
    %905 = vmatprep.subr.mxu0 %v235
    %906 = vmatpush1.msra.mxu0 %v234
    %907 = vmatprep.subr.mxu0 %v237
    %908 = vmatpush1.msra.mxu0 %v236
    %909 = vmatprep.subr.mxu0 %v239
    %910 = vmatpush1.msra.mxu0 %v238
    %911 = vmatprep.subr.mxu0 %v241
    %912 = vmatpush1.msra.mxu0 %v240
    %913 = vmatprep.subr.mxu0 %v243
    %914 = vmatpush1.msra.mxu0 %v242
    %915 = vmatprep.subr.mxu0 0.0
    %916 = vmatpush1.msra.mxu0 0.0
    %917 = vmatprep.subr.mxu0 0.0
    %918 = vmatpush1.msra.mxu0 0.0
    %919 = vmatprep.subr.mxu0 0.0
    %920 = vmatpush1.msra.mxu0 0.0
    %921 = vmatprep.subr.mxu0 0.0
    %922 = vmatpush1.msra.mxu0 0.0
    %923 = vmatprep.subr.mxu0 0.0
    %924 = vmatpush1.msra.mxu0 0.0
    %925 = vmatprep.subr.mxu0 0.0
    %926 = vmatpush1.msra.mxu0 0.0
    %927 = vmatprep.subr.mxu0 0.0
    %928 = vmatpush1.msra.mxu0 0.0
    %929 = vmatprep.subr.mxu0 0.0
    %930 = vmatpush1.msra.mxu0 0.0
    %931 = vmatprep.subr.mxu0 0.0
    %932 = vmatpush1.msra.mxu0 0.0
    %933 = vmatprep.subr.mxu0 0.0
    %934 = vmatpush1.msra.mxu0 0.0
    %935 = vmatprep.subr.mxu0 0.0
    %936 = vmatpush1.msra.mxu0 0.0
    %937 = vmatprep.subr.mxu0 0.0
    %938 = vmatpush1.msra.mxu0 0.0
    %939 = vmatprep.subr.mxu0 0.0
    %940 = vmatpush1.msra.mxu0 0.0
    %941 = vmatprep.subr.mxu0 0.0
    %942 = vmatpush1.msra.mxu0 0.0
    %943 = vmatprep.subr.mxu0 0.0
    %944 = vmatpush1.msra.mxu0 0.0
    %945 = vmatprep.subr.mxu0 0.0
    %946 = vmatpush1.msra.mxu0 0.0
    %947 = vmatprep.subr.mxu0 0.0
    %948 = vmatpush1.msra.mxu0 0.0
    %949 = vmatprep.subr.mxu0 0.0
    %950 = vmatpush1.msra.mxu0 0.0
    %951 = vmatprep.subr.mxu0 0.0
    %952 = vmatpush1.msra.mxu0 0.0
    %953 = vmatprep.subr.mxu0 0.0
    %954 = vmatpush1.msra.mxu0 0.0
    %955 = vmatprep.subr.mxu0 0.0
    %956 = vmatpush1.msra.mxu0 0.0
    %957 = vmatprep.subr.mxu0 0.0
    %958 = vmatpush1.msra.mxu0 0.0
    %959 = vmatprep.subr.mxu0 0.0
    %960 = vmatpush1.msra.mxu0 0.0
    %961 = vmatprep.subr.mxu0 0.0
    %962 = vmatpush1.msra.mxu0 0.0
    %963 = vmatprep.mubr.f32.mxu0 0.0
    %964 = vmatmul.mubr.f32.gmra.mrb[0].mxu0 %v897
    %v965 = vpop.f32.mrb[0].mxu0
    %v966 = vadd.f32 0.0, %v965
    %v967 = vpop.f32.mrb[0].mxu0
    %v968 = vadd.f32 0.0, %v967
    %969 = vdwg.mxu0
    %v970 = vadd.f32 %v892, %v966
    %v971 = vadd.f32 %v893, %v968
    %v972 = vxor.u32 %v970, 2147483648
    %v973 = vxor.u32 %v971, 2147483648
    %v974 = vmul.f32 %v972, 1.442695
    %v975 = vpow.pop %v974
    %v976 = vmul.f32 %v973, 1.442695
    %v977 = vpow.pop %v976
    %v978 = vadd.f32 %v975, 1.0
    %v979 = vadd.f32 %v977, 1.0
    %v980 = vrcp.pop %v978
    %v981 = vmul.f32 1.0, %v980
    %v982 = vrcp.pop %v979
    %v983 = vmul.f32 1.0, %v982
    %v984 = vmul.f32 %v981, %v253
    %v985 = vmul.f32 %v983, %v254
    %v986 = vsub.f32 %v984, %v255
    %v987 = vsub.f32 %v985, %v256
    %v988 = vmul.f32 %v986, %v888
    %v989 = vmul.f32 %v986, %v987
    %991 = vrot.lane.b32.xlu0 %v989, 64
    %v992 = vpop.permute.xlu0 %991
    %v994 = vadd.f32 %v988, %v992
    %v995 = vtanh.pop %v994
    %v996 = vmul.f32 %v987, %v995
    %s997 = scalar_lea.vmem [#allocation2], 112
    %v998 = vld [vmem:[%s997] sm:$0xff]
    %v999 = vld [vmem:[%s997 + $0x8] sm:$0xff]
    %1001 = vrot.lane.b32.xlu0 %v996, 64
    %v1002 = vpop.permute.xlu0 %1001
    %v1003 = vsel %vm259, %v1002, 0
    %1005 = vmatprep.subr.mxu0 %v229
    %1006 = vmatpush1.msra.mxu0 %v228
    %1007 = vmatprep.subr.mxu0 %v231
    %1008 = vmatpush1.msra.mxu0 %v230
    %1009 = vmatprep.subr.mxu0 %v233
    %1010 = vmatpush1.msra.mxu0 %v232
    %1011 = vmatprep.subr.mxu0 %v235
    %1012 = vmatpush1.msra.mxu0 %v234
    %1013 = vmatprep.subr.mxu0 %v237
    %1014 = vmatpush1.msra.mxu0 %v236
    %1015 = vmatprep.subr.mxu0 %v239
    %1016 = vmatpush1.msra.mxu0 %v238
    %1017 = vmatprep.subr.mxu0 %v241
    %1018 = vmatpush1.msra.mxu0 %v240
    %1019 = vmatprep.subr.mxu0 %v243
    %1020 = vmatpush1.msra.mxu0 %v242
    %1021 = vmatprep.subr.mxu0 0.0
    %1022 = vmatpush1.msra.mxu0 0.0
    %1023 = vmatprep.subr.mxu0 0.0
    %1024 = vmatpush1.msra.mxu0 0.0
    %1025 = vmatprep.subr.mxu0 0.0
    %1026 = vmatpush1.msra.mxu0 0.0
    %1027 = vmatprep.subr.mxu0 0.0
    %1028 = vmatpush1.msra.mxu0 0.0
    %1029 = vmatprep.subr.mxu0 0.0
    %1030 = vmatpush1.msra.mxu0 0.0
    %1031 = vmatprep.subr.mxu0 0.0
    %1032 = vmatpush1.msra.mxu0 0.0
    %1033 = vmatprep.subr.mxu0 0.0
    %1034 = vmatpush1.msra.mxu0 0.0
    %1035 = vmatprep.subr.mxu0 0.0
    %1036 = vmatpush1.msra.mxu0 0.0
    %1037 = vmatprep.subr.mxu0 0.0
    %1038 = vmatpush1.msra.mxu0 0.0
    %1039 = vmatprep.subr.mxu0 0.0
    %1040 = vmatpush1.msra.mxu0 0.0
    %1041 = vmatprep.subr.mxu0 0.0
    %1042 = vmatpush1.msra.mxu0 0.0
    %1043 = vmatprep.subr.mxu0 0.0
    %1044 = vmatpush1.msra.mxu0 0.0
    %1045 = vmatprep.subr.mxu0 0.0
    %1046 = vmatpush1.msra.mxu0 0.0
    %1047 = vmatprep.subr.mxu0 0.0
    %1048 = vmatpush1.msra.mxu0 0.0
    %1049 = vmatprep.subr.mxu0 0.0
    %1050 = vmatpush1.msra.mxu0 0.0
    %1051 = vmatprep.subr.mxu0 0.0
    %1052 = vmatpush1.msra.mxu0 0.0
    %1053 = vmatprep.subr.mxu0 0.0
    %1054 = vmatpush1.msra.mxu0 0.0
    %1055 = vmatprep.subr.mxu0 0.0
    %1056 = vmatpush1.msra.mxu0 0.0
    %1057 = vmatprep.subr.mxu0 0.0
    %1058 = vmatpush1.msra.mxu0 0.0
    %1059 = vmatprep.subr.mxu0 0.0
    %1060 = vmatpush1.msra.mxu0 0.0
    %1061 = vmatprep.subr.mxu0 0.0
    %1062 = vmatpush1.msra.mxu0 0.0
    %1063 = vmatprep.subr.mxu0 0.0
    %1064 = vmatpush1.msra.mxu0 0.0
    %1065 = vmatprep.subr.mxu0 0.0
    %1066 = vmatpush1.msra.mxu0 0.0
    %1067 = vmatprep.subr.mxu0 0.0
    %1068 = vmatpush1.msra.mxu0 0.0
    %1069 = vmatprep.mubr.f32.mxu0 0.0
    %1070 = vmatmul.mubr.f32.gmra.mrb[0].mxu0 %v1003
    %v1071 = vpop.f32.mrb[0].mxu0
    %v1072 = vadd.f32 0.0, %v1071
    %v1073 = vpop.f32.mrb[0].mxu0
    %v1074 = vadd.f32 0.0, %v1073
    %1075 = vdwg.mxu0
    %v1076 = vadd.f32 %v998, %v1072
    %v1077 = vadd.f32 %v999, %v1074
    %v1078 = vxor.u32 %v1076, 2147483648
    %v1079 = vxor.u32 %v1077, 2147483648
    %v1080 = vmul.f32 %v1078, 1.442695
    %v1081 = vpow.pop %v1080
    %v1082 = vmul.f32 %v1079, 1.442695
    %v1083 = vpow.pop %v1082
    %v1084 = vadd.f32 %v1081, 1.0
    %v1085 = vadd.f32 %v1083, 1.0
    %v1086 = vrcp.pop %v1084
    %v1087 = vmul.f32 1.0, %v1086
    %v1088 = vrcp.pop %v1085
    %v1089 = vmul.f32 1.0, %v1088
    %v1090 = vmul.f32 %v1087, %v253
    %v1091 = vmul.f32 %v1089, %v254
    %v1092 = vsub.f32 %v1090, %v255
    %v1093 = vsub.f32 %v1091, %v256
    %v1094 = vmul.f32 %v1092, %v994
    %v1095 = vmul.f32 %v1092, %v1093
    %1097 = vrot.lane.b32.xlu0 %v1095, 64
    %v1098 = vpop.permute.xlu0 %1097
    %v1100 = vadd.f32 %v1094, %v1098
    %v1101 = vtanh.pop %v1100
    %v1102 = vmul.f32 %v1093, %v1101
    %1104 = vrot.lane.b32.xlu0 %v1102, 64
    %v1105 = vpop.permute.xlu0 %1104
    %1107 = vst.msk [vmem:[#allocation3] sm:$0xff] %vm259, %v1105
    // Predicated region
    $region18: #{encoder1_forward.1} parent=1 // pred_check
      _
    $region19: #{encoder1_forward.1} parent=1 // pred_check_branch
      %1109 = sbr.rel (0) target = $region21
    $region20: #{encoder1_forward.1} parent=1 // pred_region
      %s1111 = ssub.s32 128, 128
      %1112 = vsyncadd [#allocation4], %s1111
      %s1114 = sshll.u32 [#allocation3], 4
      %s1115 = int_to_ptr.vmem [resolvable:$true] %s1114
      %1117 = dma.vmem_to_hbm [thread:$0]  %s1115, 128, %s4, [#allocation4]
    $region21: #{encoder1_forward.1} parent=1 // pred_fallthru
      _
    // Predicated region
    $region22: #{encoder1_forward.1} parent=1 // pred_check
      _
    $region23: #{encoder1_forward.1} parent=1 // pred_check_branch
      %1119 = sbr.rel (0) target = $region25
    $region24: #{encoder1_forward.1} parent=1 // pred_region
      %1120 = dma.done [#allocation4], 128
    $region25: #{encoder1_forward.1} parent=1 // pred_fallthru
      _
    %1121 = vsyncpa [#allocation4], 1

</llo_original>
